<compile_context>
chip_gen: v7x
topology: tpu7x:2x2x1
jax: 0.10.0
libtpu: 0.0.40
codegen_flags: <defaults>
</compile_context>

<pallas_src>
import functools

import jax
import jax.numpy as jnp
from jax.experimental import pallas as pl
from jax.experimental.pallas import tpu as pltpu

THRESH = 0.5  # BaseNeuron.thresh (thresh_trainable=False)


def _lif_kernel(d_ref, x_ref, out_ref, *, thresh, T):
    """One grid step == one spatial row-tile; the (short) time loop is fully
    unrolled inside the kernel.  x_ref / out_ref are (tile, T, L) VMEM tiles,
    d_ref is the precomputed sigmoid(decay) scalar in SMEM."""
    d = d_ref[0]

    # t = 0: membrane is just the first-timestep input.
    mem = x_ref[:, 0, :]
    fired = mem > thresh
    out_ref[:, 0, :] = fired.astype(out_ref.dtype)

    for t in range(1, T):
        x_t = x_ref[:, t, :]
        # mem*d*(1-spike_prev) + x  ==  where(spike_prev, x, mem*d + x)
        mem = jnp.where(fired, x_t, mem * d + x_t)
        fired = mem > thresh
        # if_clamp_the_output: clamp(0,1) is a no-op on {0,1} spikes -> omitted.
        out_ref[:, t, :] = fired.astype(out_ref.dtype)


def _pick_row_tile(rows, T, L, budget_bytes=8 << 20):
    """Largest divisor of `rows` whose f32 working set (2x input + 2x output
    double buffers + live temporaries) fits within the VMEM budget."""
    per_row = 4 * L * (4 * T + 4)
    cap = max(1, budget_bytes // per_row)
    tile = 1
    for div in range(1, rows + 1):
        if rows % div == 0 and div <= cap:
            tile = div
    return tile


def _run_lif(xk, decay, thresh=THRESH):
    """xk: (R, T, L), decay: (1,) -> (R, T, L) float32 spikes."""
    R, T, L = xk.shape
    xk = xk.astype(jnp.float32)
    # Hoisted norm_decay(decay) = sigmoid(decay); passed as an SMEM scalar.
    d = jax.nn.sigmoid(decay.astype(jnp.float32)).reshape(1)
    tile = _pick_row_tile(R, T, L)
    return pl.pallas_call(
        functools.partial(_lif_kernel, thresh=thresh, T=T),
        out_shape=jax.ShapeDtypeStruct((R, T, L), jnp.float32),
        grid_spec=pltpu.PrefetchScalarGridSpec(
            num_scalar_prefetch=0,
            grid=(R // tile,),
            in_specs=[
                pl.BlockSpec(memory_space=pltpu.MemorySpace.SMEM),  # sigmoid(decay)
                pl.BlockSpec((tile, T, L), lambda i: (i, 0, 0)),    # x row-tile
            ],
            out_specs=pl.BlockSpec((tile, T, L), lambda i: (i, 0, 0)),
        ),
        compiler_params=pltpu.CompilerParams(
            dimension_semantics=("parallel",),  # independent spatial tiles (2 TCs on v7x)
            vmem_limit_bytes=32 * 1024 * 1024,
        ),
    )(d, xk)


def mem_update_5d(x, decay, thresh=THRESH):
    """x: (B, C, T, H, W) — BaseNeuron.__5Dmem_update (+ output clamp)."""
    B, C, T, H, W = x.shape
    xk = x.reshape(B * C, T, H * W)  # pure reshape: no data movement
    out = _run_lif(xk, decay, thresh)
    return out.reshape(B, C, T, H, W)


def mem_update_3d(x, decay, thresh=THRESH):
    """x: (B, T, N) — BaseNeuron.__3Dmem_update (+ output clamp)."""
    return _run_lif(x, decay, thresh)


def fire_rate(out_last_timestep):
    """Side-effect state self.fire_rate of the *last* timestep
    (spike.sum() / numel). thresh_trainable=False so no thresh update."""
    return out_last_timestep.sum() / out_last_timestep.size


# ---------- pure-JAX reference (un-fused PyTorch form) for verification ----------
def _ref_lif_rows(xk, decay, thresh=THRESH):
    """xk: (R, T, L). Literal transliteration of the PyTorch loop."""
    d = jax.nn.sigmoid(decay.astype(jnp.float32))[0]
    T = xk.shape[1]
    mem = xk[:, 0, :].astype(jnp.float32)
    spike = None
    outs = []
    for t in range(T):
        if t >= 1:
            mem = mem * d * (1.0 - spike) + xk[:, t, :].astype(jnp.float32)
        spike = (mem > thresh).astype(jnp.float32)
        outs.append(jnp.clip(spike, 0.0, 1.0))
    return jnp.stack(outs, axis=1)


if __name__ == "__main__":
    key = jax.random.PRNGKey(0)
    k5, k3 = jax.random.split(key)

    # Parameter init per __init__: decay = ones(1) * 0.5 (deterministic).
    decay = jnp.ones((1,), jnp.float32) * 0.5

    # 5D case: (B, C, T, H, W) = (2, 4, 8, 16, 16)
    x5 = jax.random.normal(k5, (2, 4, 8, 16, 16), jnp.float32)
    out5 = jax.block_until_ready(mem_update_5d(x5, decay))
    ref5 = _ref_lif_rows(x5.reshape(2 * 4, 8, 16 * 16), decay).reshape(2, 4, 8, 16, 16)
    assert out5.shape == x5.shape and out5.dtype == jnp.float32
    assert jnp.allclose(out5, ref5), "5D mismatch vs reference"

    # 3D case: (B, T, N) = (2, 8, 32)
    x3 = jax.random.normal(k3, (2, 8, 32), jnp.float32)
    out3 = jax.block_until_ready(mem_update_3d(x3, decay))
    ref3 = _ref_lif_rows(x3, decay)
    assert jnp.allclose(out3, ref3), "3D mismatch vs reference"

    # Side-effect state: fire rate of the last timestep.
    _ = jax.block_until_ready(fire_rate(out5[:, :, -1]))

    print("KERNEL_OK")
</pallas_src>

<mosaic_0001>
module attributes {stable_mosaic.version = 11 : i64} {
  func.func @_lif_kernel(%arg0: i32, %arg1: memref<1xf32, #tpu.memory_space<smem>>, %arg2: memref<8x8x256xf32, #tpu.memory_space<vmem>>, %arg3: memref<8x8x256xf32, #tpu.memory_space<vmem>>) attributes {dimension_semantics = [#tpu.dimension_semantics<parallel>], iteration_bounds = array<i64: 1>, scalar_prefetch = 0 : i64, scratch_operands = 0 : i64, tpu.core_type = #tpu.core_type<tc>, window_params = [{transform_indices = @transform_0, window_bounds = array<i64: 1>}, {transform_indices = @transform_1, window_bounds = array<i64: 8, 8, 256>}, {transform_indices = @transform_2, window_bounds = array<i64: 8, 8, 256>}]} {
    %c0 = arith.constant 0 : index
    %0 = memref.load %arg1[%c0] : memref<1xf32, #tpu.memory_space<smem>>
    %c0_0 = arith.constant 0 : index
    %c0_1 = arith.constant 0 : index
    %c0_2 = arith.constant 0 : index
    %1 = vector.load %arg2[%c0_0, %c0_1, %c0_2] : memref<8x8x256xf32, #tpu.memory_space<vmem>>, vector<8x1x256xf32>
    %2 = vector.shape_cast %1 : vector<8x1x256xf32> to vector<8x256xf32>
    %cst = arith.constant 5.000000e-01 : f32
    %3 = vector.broadcast %cst : f32 to vector<8x256xf32>
    %4 = arith.cmpf ogt, %2, %3 : vector<8x256xf32>
    %5 = arith.extui %4 : vector<8x256xi1> to vector<8x256xi32>
    %6 = arith.sitofp %5 : vector<8x256xi32> to vector<8x256xf32>
    %c0_3 = arith.constant 0 : index
    %c0_4 = arith.constant 0 : index
    %c0_5 = arith.constant 0 : index
    %7 = vector.load %arg3[%c0_3, %c0_4, %c0_5] : memref<8x8x256xf32, #tpu.memory_space<vmem>>, vector<8x1x256xf32>
    %8 = vector.shape_cast %7 : vector<8x1x256xf32> to vector<8x256xf32>
    %9 = vector.shape_cast %6 : vector<8x256xf32> to vector<8x1x256xf32>
    tpu.vector_store %arg3[%c0_3, %c0_4, %c0_5], %9 {strides = array<i32>} : memref<8x8x256xf32, #tpu.memory_space<vmem>>, vector<8x1x256xf32>,
    %c0_6 = arith.constant 0 : index
    %c1 = arith.constant 1 : index
    %c0_7 = arith.constant 0 : index
    %10 = vector.load %arg2[%c0_6, %c1, %c0_7] : memref<8x8x256xf32, #tpu.memory_space<vmem>>, vector<8x1x256xf32>
    %11 = vector.shape_cast %10 : vector<8x1x256xf32> to vector<8x256xf32>
    %12 = vector.broadcast %0 : f32 to vector<8x256xf32>
    %13 = arith.mulf %2, %12 : vector<8x256xf32>
    %14 = arith.addf %13, %11 : vector<8x256xf32>
    %15 = arith.select %4, %11, %14 : vector<8x256xi1>, vector<8x256xf32>
    %cst_8 = arith.constant 5.000000e-01 : f32
    %16 = vector.broadcast %cst_8 : f32 to vector<8x256xf32>
    %17 = arith.cmpf ogt, %15, %16 : vector<8x256xf32>
    %18 = arith.extui %17 : vector<8x256xi1> to vector<8x256xi32>
    %19 = arith.sitofp %18 : vector<8x256xi32> to vector<8x256xf32>
    %c0_9 = arith.constant 0 : index
    %c1_10 = arith.constant 1 : index
    %c0_11 = arith.constant 0 : index
    %20 = vector.load %arg3[%c0_9, %c1_10, %c0_11] : memref<8x8x256xf32, #tpu.memory_space<vmem>>, vector<8x1x256xf32>
    %21 = vector.shape_cast %20 : vector<8x1x256xf32> to vector<8x256xf32>
    %22 = vector.shape_cast %19 : vector<8x256xf32> to vector<8x1x256xf32>
    tpu.vector_store %arg3[%c0_9, %c1_10, %c0_11], %22 {strides = array<i32>} : memref<8x8x256xf32, #tpu.memory_space<vmem>>, vector<8x1x256xf32>,
    %c0_12 = arith.constant 0 : index
    %c2 = arith.constant 2 : index
    %c0_13 = arith.constant 0 : index
    %23 = vector.load %arg2[%c0_12, %c2, %c0_13] : memref<8x8x256xf32, #tpu.memory_space<vmem>>, vector<8x1x256xf32>
    %24 = vector.shape_cast %23 : vector<8x1x256xf32> to vector<8x256xf32>
    %25 = vector.broadcast %0 : f32 to vector<8x256xf32>
    %26 = arith.mulf %15, %25 : vector<8x256xf32>
    %27 = arith.addf %26, %24 : vector<8x256xf32>
    %28 = arith.select %17, %24, %27 : vector<8x256xi1>, vector<8x256xf32>
    %cst_14 = arith.constant 5.000000e-01 : f32
    %29 = vector.broadcast %cst_14 : f32 to vector<8x256xf32>
    %30 = arith.cmpf ogt, %28, %29 : vector<8x256xf32>
    %31 = arith.extui %30 : vector<8x256xi1> to vector<8x256xi32>
    %32 = arith.sitofp %31 : vector<8x256xi32> to vector<8x256xf32>
    %c0_15 = arith.constant 0 : index
    %c2_16 = arith.constant 2 : index
    %c0_17 = arith.constant 0 : index
    %33 = vector.load %arg3[%c0_15, %c2_16, %c0_17] : memref<8x8x256xf32, #tpu.memory_space<vmem>>, vector<8x1x256xf32>
    %34 = vector.shape_cast %33 : vector<8x1x256xf32> to vector<8x256xf32>
    %35 = vector.shape_cast %32 : vector<8x256xf32> to vector<8x1x256xf32>
    tpu.vector_store %arg3[%c0_15, %c2_16, %c0_17], %35 {strides = array<i32>} : memref<8x8x256xf32, #tpu.memory_space<vmem>>, vector<8x1x256xf32>,
    %c0_18 = arith.constant 0 : index
    %c3 = arith.constant 3 : index
    %c0_19 = arith.constant 0 : index
    %36 = vector.load %arg2[%c0_18, %c3, %c0_19] : memref<8x8x256xf32, #tpu.memory_space<vmem>>, vector<8x1x256xf32>
    %37 = vector.shape_cast %36 : vector<8x1x256xf32> to vector<8x256xf32>
    %38 = vector.broadcast %0 : f32 to vector<8x256xf32>
    %39 = arith.mulf %28, %38 : vector<8x256xf32>
    %40 = arith.addf %39, %37 : vector<8x256xf32>
    %41 = arith.select %30, %37, %40 : vector<8x256xi1>, vector<8x256xf32>
    %cst_20 = arith.constant 5.000000e-01 : f32
    %42 = vector.broadcast %cst_20 : f32 to vector<8x256xf32>
    %43 = arith.cmpf ogt, %41, %42 : vector<8x256xf32>
    %44 = arith.extui %43 : vector<8x256xi1> to vector<8x256xi32>
    %45 = arith.sitofp %44 : vector<8x256xi32> to vector<8x256xf32>
    %c0_21 = arith.constant 0 : index
    %c3_22 = arith.constant 3 : index
    %c0_23 = arith.constant 0 : index
    %46 = vector.load %arg3[%c0_21, %c3_22, %c0_23] : memref<8x8x256xf32, #tpu.memory_space<vmem>>, vector<8x1x256xf32>
    %47 = vector.shape_cast %46 : vector<8x1x256xf32> to vector<8x256xf32>
    %48 = vector.shape_cast %45 : vector<8x256xf32> to vector<8x1x256xf32>
    tpu.vector_store %arg3[%c0_21, %c3_22, %c0_23], %48 {strides = array<i32>} : memref<8x8x256xf32, #tpu.memory_space<vmem>>, vector<8x1x256xf32>,
    %c0_24 = arith.constant 0 : index
    %c4 = arith.constant 4 : index
    %c0_25 = arith.constant 0 : index
    %49 = vector.load %arg2[%c0_24, %c4, %c0_25] : memref<8x8x256xf32, #tpu.memory_space<vmem>>, vector<8x1x256xf32>
    %50 = vector.shape_cast %49 : vector<8x1x256xf32> to vector<8x256xf32>
    %51 = vector.broadcast %0 : f32 to vector<8x256xf32>
    %52 = arith.mulf %41, %51 : vector<8x256xf32>
    %53 = arith.addf %52, %50 : vector<8x256xf32>
    %54 = arith.select %43, %50, %53 : vector<8x256xi1>, vector<8x256xf32>
    %cst_26 = arith.constant 5.000000e-01 : f32
    %55 = vector.broadcast %cst_26 : f32 to vector<8x256xf32>
    %56 = arith.cmpf ogt, %54, %55 : vector<8x256xf32>
    %57 = arith.extui %56 : vector<8x256xi1> to vector<8x256xi32>
    %58 = arith.sitofp %57 : vector<8x256xi32> to vector<8x256xf32>
    %c0_27 = arith.constant 0 : index
    %c4_28 = arith.constant 4 : index
    %c0_29 = arith.constant 0 : index
    %59 = vector.load %arg3[%c0_27, %c4_28, %c0_29] : memref<8x8x256xf32, #tpu.memory_space<vmem>>, vector<8x1x256xf32>
    %60 = vector.shape_cast %59 : vector<8x1x256xf32> to vector<8x256xf32>
    %61 = vector.shape_cast %58 : vector<8x256xf32> to vector<8x1x256xf32>
    tpu.vector_store %arg3[%c0_27, %c4_28, %c0_29], %61 {strides = array<i32>} : memref<8x8x256xf32, #tpu.memory_space<vmem>>, vector<8x1x256xf32>,
    %c0_30 = arith.constant 0 : index
    %c5 = arith.constant 5 : index
    %c0_31 = arith.constant 0 : index
    %62 = vector.load %arg2[%c0_30, %c5, %c0_31] : memref<8x8x256xf32, #tpu.memory_space<vmem>>, vector<8x1x256xf32>
    %63 = vector.shape_cast %62 : vector<8x1x256xf32> to vector<8x256xf32>
    %64 = vector.broadcast %0 : f32 to vector<8x256xf32>
    %65 = arith.mulf %54, %64 : vector<8x256xf32>
    %66 = arith.addf %65, %63 : vector<8x256xf32>
    %67 = arith.select %56, %63, %66 : vector<8x256xi1>, vector<8x256xf32>
    %cst_32 = arith.constant 5.000000e-01 : f32
    %68 = vector.broadcast %cst_32 : f32 to vector<8x256xf32>
    %69 = arith.cmpf ogt, %67, %68 : vector<8x256xf32>
    %70 = arith.extui %69 : vector<8x256xi1> to vector<8x256xi32>
    %71 = arith.sitofp %70 : vector<8x256xi32> to vector<8x256xf32>
    %c0_33 = arith.constant 0 : index
    %c5_34 = arith.constant 5 : index
    %c0_35 = arith.constant 0 : index
    %72 = vector.load %arg3[%c0_33, %c5_34, %c0_35] : memref<8x8x256xf32, #tpu.memory_space<vmem>>, vector<8x1x256xf32>
    %73 = vector.shape_cast %72 : vector<8x1x256xf32> to vector<8x256xf32>
    %74 = vector.shape_cast %71 : vector<8x256xf32> to vector<8x1x256xf32>
    tpu.vector_store %arg3[%c0_33, %c5_34, %c0_35], %74 {strides = array<i32>} : memref<8x8x256xf32, #tpu.memory_space<vmem>>, vector<8x1x256xf32>,
    %c0_36 = arith.constant 0 : index
    %c6 = arith.constant 6 : index
    %c0_37 = arith.constant 0 : index
    %75 = vector.load %arg2[%c0_36, %c6, %c0_37] : memref<8x8x256xf32, #tpu.memory_space<vmem>>, vector<8x1x256xf32>
    %76 = vector.shape_cast %75 : vector<8x1x256xf32> to vector<8x256xf32>
    %77 = vector.broadcast %0 : f32 to vector<8x256xf32>
    %78 = arith.mulf %67, %77 : vector<8x256xf32>
    %79 = arith.addf %78, %76 : vector<8x256xf32>
    %80 = arith.select %69, %76, %79 : vector<8x256xi1>, vector<8x256xf32>
    %cst_38 = arith.constant 5.000000e-01 : f32
    %81 = vector.broadcast %cst_38 : f32 to vector<8x256xf32>
    %82 = arith.cmpf ogt, %80, %81 : vector<8x256xf32>
    %83 = arith.extui %82 : vector<8x256xi1> to vector<8x256xi32>
    %84 = arith.sitofp %83 : vector<8x256xi32> to vector<8x256xf32>
    %c0_39 = arith.constant 0 : index
    %c6_40 = arith.constant 6 : index
    %c0_41 = arith.constant 0 : index
    %85 = vector.load %arg3[%c0_39, %c6_40, %c0_41] : memref<8x8x256xf32, #tpu.memory_space<vmem>>, vector<8x1x256xf32>
    %86 = vector.shape_cast %85 : vector<8x1x256xf32> to vector<8x256xf32>
    %87 = vector.shape_cast %84 : vector<8x256xf32> to vector<8x1x256xf32>
    tpu.vector_store %arg3[%c0_39, %c6_40, %c0_41], %87 {strides = array<i32>} : memref<8x8x256xf32, #tpu.memory_space<vmem>>, vector<8x1x256xf32>,
    %c0_42 = arith.constant 0 : index
    %c7 = arith.constant 7 : index
    %c0_43 = arith.constant 0 : index
    %88 = vector.load %arg2[%c0_42, %c7, %c0_43] : memref<8x8x256xf32, #tpu.memory_space<vmem>>, vector<8x1x256xf32>
    %89 = vector.shape_cast %88 : vector<8x1x256xf32> to vector<8x256xf32>
    %90 = vector.broadcast %0 : f32 to vector<8x256xf32>
    %91 = arith.mulf %80, %90 : vector<8x256xf32>
    %92 = arith.addf %91, %89 : vector<8x256xf32>
    %93 = arith.select %82, %89, %92 : vector<8x256xi1>, vector<8x256xf32>
    %cst_44 = arith.constant 5.000000e-01 : f32
    %94 = vector.broadcast %cst_44 : f32 to vector<8x256xf32>
    %95 = arith.cmpf ogt, %93, %94 : vector<8x256xf32>
    %96 = arith.extui %95 : vector<8x256xi1> to vector<8x256xi32>
    %97 = arith.sitofp %96 : vector<8x256xi32> to vector<8x256xf32>
    %c0_45 = arith.constant 0 : index
    %c7_46 = arith.constant 7 : index
    %c0_47 = arith.constant 0 : index
    %98 = vector.load %arg3[%c0_45, %c7_46, %c0_47] : memref<8x8x256xf32, #tpu.memory_space<vmem>>, vector<8x1x256xf32>
    %99 = vector.shape_cast %98 : vector<8x1x256xf32> to vector<8x256xf32>
    %100 = vector.shape_cast %97 : vector<8x256xf32> to vector<8x1x256xf32>
    tpu.vector_store %arg3[%c0_45, %c7_46, %c0_47], %100 {strides = array<i32>} : memref<8x8x256xf32, #tpu.memory_space<vmem>>, vector<8x1x256xf32>,
    return
  }
  func.func @transform_0(%arg0: i32) -> i32 {
    %c0_i32 = arith.constant 0 : i32
    %c0_i32_0 = arith.constant 0 : i32
    return %c0_i32 : i32
  }
  func.func @transform_1(%arg0: i32) -> (i32, i32, i32) {
    %c0_i32 = arith.constant 0 : i32
    %c0_i32_0 = arith.constant 0 : i32
    %c0_i32_1 = arith.constant 0 : i32
    return %arg0, %c0_i32, %c0_i32_0 : i32, i32, i32
  }
  func.func @transform_2(%arg0: i32) -> (i32, i32, i32) {
    %c0_i32 = arith.constant 0 : i32
    %c0_i32_0 = arith.constant 0 : i32
    %c0_i32_1 = arith.constant 0 : i32
    return %arg0, %c0_i32, %c0_i32_0 : i32, i32, i32
  }
}

</mosaic_0001>

<llo_original>
// kernel: tpu_custom_call.1
$region0: #{tpu_custom_call.1}
  #allocation0 [shape = 'u32[]', space=smem, size = 0x4, offset = 0x4, fixed_abs, tag = 'smem constant byte address 0x4 - core index']
  #allocation1 [shape = 'u32[144,128]{1,0:T(1,128)}', space=vmem, size = 0x12000, scoped, tag = 'internal scratch']
  #allocation2 [shape = 'f32[1]{0:T(128)S(6)}', space=smem, size = 0x200, scoped, tag = 'scoped memory for tpu_custom_call.1']
  %s0 = inlined_call_operand.<no memory space> [shape: f32[1], index: 0, kind: input, shape index: {}]
  %s1 = inlined_call_operand.hbm [shape: f32[8,8,256], index: 1, kind: input, shape index: {}]
  %s2 = inlined_call_operand.hbm [shape: f32[8,8,256], index: 2, kind: output, shape index: {}]
  %s3 = sld [smem:[#allocation0]]
  $region22: #{tpu_custom_call.1} parent=0
    _
  %s5 = ssub.s32 1, %s3
  %s6 = scalar_select 0, %s5, %s3
  %7 = sst [smem:[#allocation2]] %s0
  $region1: #{tpu_custom_call.1} parent=0
    #allocation3 [shape = 'u8[65536]{0}', space=vmem, size = 0x10000, scoped, tag = 'input window, operand 1, single buffered']
    #allocation4 [shape = 's32[1]{0}', space=sflag, size = 0x4, scoped, tag = 'scoped memory for tpu_custom_call.1']
    #allocation5 [shape = 's32[1]{0}', space=sflag, size = 0x4, scoped, tag = 'scoped memory for tpu_custom_call.1']
    #allocation6 [shape = 'u8[65536]{0}', space=vmem, size = 0x10000, scoped, tag = 'output window, operand 0, single buffered']
    %8 = vsyncpa [#allocation4], 0
    %9 = vsyncpa [#allocation5], 0
    // Predicated region
    $region2: #{tpu_custom_call.1} parent=1 // pred_check
      _
    $region3: #{tpu_custom_call.1} parent=1 // pred_check_branch
      %11 = sbr.rel (0) target = $region5
    $region4: #{tpu_custom_call.1} parent=1 // pred_region
      _
    $region5: #{tpu_custom_call.1} parent=1 // pred_fallthru
      _
    // Predicated region
    $region6: #{tpu_custom_call.1} parent=1 // pred_check
      _
    $region7: #{tpu_custom_call.1} parent=1 // pred_check_branch
      %13 = sbr.rel (0) target = $region9
    $region8: #{tpu_custom_call.1} parent=1 // pred_region
      %s15 = ssub.s32 2048, 2048
      %16 = vsyncadd [#allocation4], %s15
      %s17 = sshll.u32 [#allocation3], 4
      %s18 = int_to_ptr.vmem [resolvable:$true] %s17
      %23 = dma.hbm_to_vmem [thread:$0]  %s1, 2048, %s18, [#allocation4], 256, 256, 16
    $region9: #{tpu_custom_call.1} parent=1 // pred_fallthru
      _
    // Predicated region
    $region10: #{tpu_custom_call.1} parent=1 // pred_check
      _
    $region11: #{tpu_custom_call.1} parent=1 // pred_check_branch
      %25 = sbr.rel (0) target = $region13
    $region12: #{tpu_custom_call.1} parent=1 // pred_region
      %26 = dma.done [#allocation4], 2048
    $region13: #{tpu_custom_call.1} parent=1 // pred_fallthru
      _
    %s27 = sld [smem:[#allocation2]]
    %v28 = vld [vmem:[#allocation3] ss:$8 sm:$0x3]
    %s29 = scalar_lea.vmem [#allocation3], 16
    %v30 = vld [vmem:[%s29] ss:$8 sm:$0x3]
    %s31 = scalar_lea.vmem [#allocation3], 32
    %v32 = vld [vmem:[%s31] ss:$8 sm:$0x3]
    %s33 = scalar_lea.vmem [#allocation3], 48
    %v34 = vld [vmem:[%s33] ss:$8 sm:$0x3]
    %s35 = scalar_lea.vmem [#allocation3], 64
    %v36 = vld [vmem:[%s35] ss:$8 sm:$0x3]
    %s37 = scalar_lea.vmem [#allocation3], 80
    %v38 = vld [vmem:[%s37] ss:$8 sm:$0x3]
    %s39 = scalar_lea.vmem [#allocation3], 96
    %v40 = vld [vmem:[%s39] ss:$8 sm:$0x3]
    %s41 = scalar_lea.vmem [#allocation3], 112
    %v42 = vld [vmem:[%s41] ss:$8 sm:$0x3]
    %vm43 = vcmp.gt.f32.partialorder %v28, 0.5
    %vm44 = vcmp.gt.f32.partialorder %v30, 0.5
    %vm45 = vcmp.gt.f32.partialorder %v32, 0.5
    %vm46 = vcmp.gt.f32.partialorder %v34, 0.5
    %vm47 = vcmp.gt.f32.partialorder %v36, 0.5
    %vm48 = vcmp.gt.f32.partialorder %v38, 0.5
    %vm49 = vcmp.gt.f32.partialorder %v40, 0.5
    %vm50 = vcmp.gt.f32.partialorder %v42, 0.5
    %v51 = vsel %vm43, 1, 0
    %v52 = vsel %vm44, 1, 0
    %v53 = vsel %vm45, 1, 0
    %v54 = vsel %vm46, 1, 0
    %v55 = vsel %vm47, 1, 0
    %v56 = vsel %vm48, 1, 0
    %v57 = vsel %vm49, 1, 0
    %v58 = vsel %vm50, 1, 0
    %v59 = vcvt.s32.f32 %v51
    %v60 = vcvt.s32.f32 %v52
    %v61 = vcvt.s32.f32 %v53
    %v62 = vcvt.s32.f32 %v54
    %v63 = vcvt.s32.f32 %v55
    %v64 = vcvt.s32.f32 %v56
    %v65 = vcvt.s32.f32 %v57
    %v66 = vcvt.s32.f32 %v58
    %v67 = vlaneseq
    %vm68 = vcmp.ge.s32.totalorder %v67, 0
    %vm69 = vcmp.lt.s32.totalorder %v67, 256
    %vm70 = vmand %vm68, %vm69
    %71 = vst.msk [vmem:[#allocation6] ss:$8 sm:$0x3] %vm70, %v59
    %72 = vst.msk [vmem:[#allocation6] ss:$8 sm:$0x0] %vm70, %v59
    %s73 = scalar_lea.vmem [#allocation6], 16
    %74 = vst.msk [vmem:[%s73] ss:$8 sm:$0x3] %vm70, %v60
    %75 = vst.msk [vmem:[%s73] ss:$8 sm:$0x0] %vm70, %v60
    %s76 = scalar_lea.vmem [#allocation6], 32
    %77 = vst.msk [vmem:[%s76] ss:$8 sm:$0x3] %vm70, %v61
    %78 = vst.msk [vmem:[%s76] ss:$8 sm:$0x0] %vm70, %v61
    %s79 = scalar_lea.vmem [#allocation6], 48
    %80 = vst.msk [vmem:[%s79] ss:$8 sm:$0x3] %vm70, %v62
    %81 = vst.msk [vmem:[%s79] ss:$8 sm:$0x0] %vm70, %v62
    %s82 = scalar_lea.vmem [#allocation6], 64
    %83 = vst.msk [vmem:[%s82] ss:$8 sm:$0x3] %vm70, %v63
    %84 = vst.msk [vmem:[%s82] ss:$8 sm:$0x0] %vm70, %v63
    %s85 = scalar_lea.vmem [#allocation6], 80
    %86 = vst.msk [vmem:[%s85] ss:$8 sm:$0x3] %vm70, %v64
    %87 = vst.msk [vmem:[%s85] ss:$8 sm:$0x0] %vm70, %v64
    %s88 = scalar_lea.vmem [#allocation6], 96
    %89 = vst.msk [vmem:[%s88] ss:$8 sm:$0x3] %vm70, %v65
    %90 = vst.msk [vmem:[%s88] ss:$8 sm:$0x0] %vm70, %v65
    %s91 = scalar_lea.vmem [#allocation6], 112
    %92 = vst.msk [vmem:[%s91] ss:$8 sm:$0x3] %vm70, %v66
    %93 = vst.msk [vmem:[%s91] ss:$8 sm:$0x0] %vm70, %v66
    %s94 = scalar_lea.vmem [#allocation3], 1
    %v95 = vld [vmem:[%s94] ss:$8 sm:$0x3]
    %s96 = scalar_lea.vmem [#allocation3], 17
    %v97 = vld [vmem:[%s96] ss:$8 sm:$0x3]
    %s98 = scalar_lea.vmem [#allocation3], 33
    %v99 = vld [vmem:[%s98] ss:$8 sm:$0x3]
    %s100 = scalar_lea.vmem [#allocation3], 49
    %v101 = vld [vmem:[%s100] ss:$8 sm:$0x3]
    %s102 = scalar_lea.vmem [#allocation3], 65
    %v103 = vld [vmem:[%s102] ss:$8 sm:$0x3]
    %s104 = scalar_lea.vmem [#allocation3], 81
    %v105 = vld [vmem:[%s104] ss:$8 sm:$0x3]
    %s106 = scalar_lea.vmem [#allocation3], 97
    %v107 = vld [vmem:[%s106] ss:$8 sm:$0x3]
    %s108 = scalar_lea.vmem [#allocation3], 113
    %v109 = vld [vmem:[%s108] ss:$8 sm:$0x3]
    %v110 = vstv %s27
    %v111 = vmul.f32 %v28, %v110
    %v112 = vmul.f32 %v30, %v110
    %v113 = vmul.f32 %v32, %v110
    %v114 = vmul.f32 %v34, %v110
    %v115 = vmul.f32 %v36, %v110
    %v116 = vmul.f32 %v38, %v110
    %v117 = vmul.f32 %v40, %v110
    %v118 = vmul.f32 %v42, %v110
    %v119 = vadd.f32 %v111, %v95
    %v120 = vadd.f32 %v112, %v97
    %v121 = vadd.f32 %v113, %v99
    %v122 = vadd.f32 %v114, %v101
    %v123 = vadd.f32 %v115, %v103
    %v124 = vadd.f32 %v116, %v105
    %v125 = vadd.f32 %v117, %v107
    %v126 = vadd.f32 %v118, %v109
    %v127 = vsel %vm43, %v95, %v119
    %v128 = vsel %vm44, %v97, %v120
    %v129 = vsel %vm45, %v99, %v121
    %v130 = vsel %vm46, %v101, %v122
    %v131 = vsel %vm47, %v103, %v123
    %v132 = vsel %vm48, %v105, %v124
    %v133 = vsel %vm49, %v107, %v125
    %v134 = vsel %vm50, %v109, %v126
    %vm135 = vcmp.gt.f32.partialorder %v127, 0.5
    %vm136 = vcmp.gt.f32.partialorder %v128, 0.5
    %vm137 = vcmp.gt.f32.partialorder %v129, 0.5
    %vm138 = vcmp.gt.f32.partialorder %v130, 0.5
    %vm139 = vcmp.gt.f32.partialorder %v131, 0.5
    %vm140 = vcmp.gt.f32.partialorder %v132, 0.5
    %vm141 = vcmp.gt.f32.partialorder %v133, 0.5
    %vm142 = vcmp.gt.f32.partialorder %v134, 0.5
    %v143 = vsel %vm135, 1, 0
    %v144 = vsel %vm136, 1, 0
    %v145 = vsel %vm137, 1, 0
    %v146 = vsel %vm138, 1, 0
    %v147 = vsel %vm139, 1, 0
    %v148 = vsel %vm140, 1, 0
    %v149 = vsel %vm141, 1, 0
    %v150 = vsel %vm142, 1, 0
    %v151 = vcvt.s32.f32 %v143
    %v152 = vcvt.s32.f32 %v144
    %v153 = vcvt.s32.f32 %v145
    %v154 = vcvt.s32.f32 %v146
    %v155 = vcvt.s32.f32 %v147
    %v156 = vcvt.s32.f32 %v148
    %v157 = vcvt.s32.f32 %v149
    %v158 = vcvt.s32.f32 %v150
    %s159 = scalar_lea.vmem [#allocation6], 1
    %160 = vst.msk [vmem:[%s159] ss:$8 sm:$0x3] %vm70, %v151
    %161 = vst.msk [vmem:[%s159] ss:$8 sm:$0x0] %vm70, %v151
    %s162 = scalar_lea.vmem [#allocation6], 17
    %163 = vst.msk [vmem:[%s162] ss:$8 sm:$0x3] %vm70, %v152
    %164 = vst.msk [vmem:[%s162] ss:$8 sm:$0x0] %vm70, %v152
    %s165 = scalar_lea.vmem [#allocation6], 33
    %166 = vst.msk [vmem:[%s165] ss:$8 sm:$0x3] %vm70, %v153
    %167 = vst.msk [vmem:[%s165] ss:$8 sm:$0x0] %vm70, %v153
    %s168 = scalar_lea.vmem [#allocation6], 49
    %169 = vst.msk [vmem:[%s168] ss:$8 sm:$0x3] %vm70, %v154
    %170 = vst.msk [vmem:[%s168] ss:$8 sm:$0x0] %vm70, %v154
    %s171 = scalar_lea.vmem [#allocation6], 65
    %172 = vst.msk [vmem:[%s171] ss:$8 sm:$0x3] %vm70, %v155
    %173 = vst.msk [vmem:[%s171] ss:$8 sm:$0x0] %vm70, %v155
    %s174 = scalar_lea.vmem [#allocation6], 81
    %175 = vst.msk [vmem:[%s174] ss:$8 sm:$0x3] %vm70, %v156
    %176 = vst.msk [vmem:[%s174] ss:$8 sm:$0x0] %vm70, %v156
    %s177 = scalar_lea.vmem [#allocation6], 97
    %178 = vst.msk [vmem:[%s177] ss:$8 sm:$0x3] %vm70, %v157
    %179 = vst.msk [vmem:[%s177] ss:$8 sm:$0x0] %vm70, %v157
    %s180 = scalar_lea.vmem [#allocation6], 113
    %181 = vst.msk [vmem:[%s180] ss:$8 sm:$0x3] %vm70, %v158
    %182 = vst.msk [vmem:[%s180] ss:$8 sm:$0x0] %vm70, %v158
    %s183 = scalar_lea.vmem [#allocation3], 2
    %v184 = vld [vmem:[%s183] ss:$8 sm:$0x3]
    %s185 = scalar_lea.vmem [#allocation3], 18
    %v186 = vld [vmem:[%s185] ss:$8 sm:$0x3]
    %s187 = scalar_lea.vmem [#allocation3], 34
    %v188 = vld [vmem:[%s187] ss:$8 sm:$0x3]
    %s189 = scalar_lea.vmem [#allocation3], 50
    %v190 = vld [vmem:[%s189] ss:$8 sm:$0x3]
    %s191 = scalar_lea.vmem [#allocation3], 66
    %v192 = vld [vmem:[%s191] ss:$8 sm:$0x3]
    %s193 = scalar_lea.vmem [#allocation3], 82
    %v194 = vld [vmem:[%s193] ss:$8 sm:$0x3]
    %s195 = scalar_lea.vmem [#allocation3], 98
    %v196 = vld [vmem:[%s195] ss:$8 sm:$0x3]
    %s197 = scalar_lea.vmem [#allocation3], 114
    %v198 = vld [vmem:[%s197] ss:$8 sm:$0x3]
    %v199 = vmul.f32 %v127, %v110
    %v200 = vmul.f32 %v128, %v110
    %v201 = vmul.f32 %v129, %v110
    %v202 = vmul.f32 %v130, %v110
    %v203 = vmul.f32 %v131, %v110
    %v204 = vmul.f32 %v132, %v110
    %v205 = vmul.f32 %v133, %v110
    %v206 = vmul.f32 %v134, %v110
    %v207 = vadd.f32 %v199, %v184
    %v208 = vadd.f32 %v200, %v186
    %v209 = vadd.f32 %v201, %v188
    %v210 = vadd.f32 %v202, %v190
    %v211 = vadd.f32 %v203, %v192
    %v212 = vadd.f32 %v204, %v194
    %v213 = vadd.f32 %v205, %v196
    %v214 = vadd.f32 %v206, %v198
    %v215 = vsel %vm135, %v184, %v207
    %v216 = vsel %vm136, %v186, %v208
    %v217 = vsel %vm137, %v188, %v209
    %v218 = vsel %vm138, %v190, %v210
    %v219 = vsel %vm139, %v192, %v211
    %v220 = vsel %vm140, %v194, %v212
    %v221 = vsel %vm141, %v196, %v213
    %v222 = vsel %vm142, %v198, %v214
    %vm223 = vcmp.gt.f32.partialorder %v215, 0.5
    %vm224 = vcmp.gt.f32.partialorder %v216, 0.5
    %vm225 = vcmp.gt.f32.partialorder %v217, 0.5
    %vm226 = vcmp.gt.f32.partialorder %v218, 0.5
    %vm227 = vcmp.gt.f32.partialorder %v219, 0.5
    %vm228 = vcmp.gt.f32.partialorder %v220, 0.5
    %vm229 = vcmp.gt.f32.partialorder %v221, 0.5
    %vm230 = vcmp.gt.f32.partialorder %v222, 0.5
    %v231 = vsel %vm223, 1, 0
    %v232 = vsel %vm224, 1, 0
    %v233 = vsel %vm225, 1, 0
    %v234 = vsel %vm226, 1, 0
    %v235 = vsel %vm227, 1, 0
    %v236 = vsel %vm228, 1, 0
    %v237 = vsel %vm229, 1, 0
    %v238 = vsel %vm230, 1, 0
    %v239 = vcvt.s32.f32 %v231
    %v240 = vcvt.s32.f32 %v232
    %v241 = vcvt.s32.f32 %v233
    %v242 = vcvt.s32.f32 %v234
    %v243 = vcvt.s32.f32 %v235
    %v244 = vcvt.s32.f32 %v236
    %v245 = vcvt.s32.f32 %v237
    %v246 = vcvt.s32.f32 %v238
    %s247 = scalar_lea.vmem [#allocation6], 2
    %248 = vst.msk [vmem:[%s247] ss:$8 sm:$0x3] %vm70, %v239
    %249 = vst.msk [vmem:[%s247] ss:$8 sm:$0x0] %vm70, %v239
    %s250 = scalar_lea.vmem [#allocation6], 18
    %251 = vst.msk [vmem:[%s250] ss:$8 sm:$0x3] %vm70, %v240
    %252 = vst.msk [vmem:[%s250] ss:$8 sm:$0x0] %vm70, %v240
    %s253 = scalar_lea.vmem [#allocation6], 34
    %254 = vst.msk [vmem:[%s253] ss:$8 sm:$0x3] %vm70, %v241
    %255 = vst.msk [vmem:[%s253] ss:$8 sm:$0x0] %vm70, %v241
    %s256 = scalar_lea.vmem [#allocation6], 50
    %257 = vst.msk [vmem:[%s256] ss:$8 sm:$0x3] %vm70, %v242
    %258 = vst.msk [vmem:[%s256] ss:$8 sm:$0x0] %vm70, %v242
    %s259 = scalar_lea.vmem [#allocation6], 66
    %260 = vst.msk [vmem:[%s259] ss:$8 sm:$0x3] %vm70, %v243
    %261 = vst.msk [vmem:[%s259] ss:$8 sm:$0x0] %vm70, %v243
    %s262 = scalar_lea.vmem [#allocation6], 82
    %263 = vst.msk [vmem:[%s262] ss:$8 sm:$0x3] %vm70, %v244
    %264 = vst.msk [vmem:[%s262] ss:$8 sm:$0x0] %vm70, %v244
    %s265 = scalar_lea.vmem [#allocation6], 98
    %266 = vst.msk [vmem:[%s265] ss:$8 sm:$0x3] %vm70, %v245
    %267 = vst.msk [vmem:[%s265] ss:$8 sm:$0x0] %vm70, %v245
    %s268 = scalar_lea.vmem [#allocation6], 114
    %269 = vst.msk [vmem:[%s268] ss:$8 sm:$0x3] %vm70, %v246
    %270 = vst.msk [vmem:[%s268] ss:$8 sm:$0x0] %vm70, %v246
    %s271 = scalar_lea.vmem [#allocation3], 3
    %v272 = vld [vmem:[%s271] ss:$8 sm:$0x3]
    %s273 = scalar_lea.vmem [#allocation3], 19
    %v274 = vld [vmem:[%s273] ss:$8 sm:$0x3]
    %s275 = scalar_lea.vmem [#allocation3], 35
    %v276 = vld [vmem:[%s275] ss:$8 sm:$0x3]
    %s277 = scalar_lea.vmem [#allocation3], 51
    %v278 = vld [vmem:[%s277] ss:$8 sm:$0x3]
    %s279 = scalar_lea.vmem [#allocation3], 67
    %v280 = vld [vmem:[%s279] ss:$8 sm:$0x3]
    %s281 = scalar_lea.vmem [#allocation3], 83
    %v282 = vld [vmem:[%s281] ss:$8 sm:$0x3]
    %s283 = scalar_lea.vmem [#allocation3], 99
    %v284 = vld [vmem:[%s283] ss:$8 sm:$0x3]
    %s285 = scalar_lea.vmem [#allocation3], 115
    %v286 = vld [vmem:[%s285] ss:$8 sm:$0x3]
    %v287 = vmul.f32 %v215, %v110
    %v288 = vmul.f32 %v216, %v110
    %v289 = vmul.f32 %v217, %v110
    %v290 = vmul.f32 %v218, %v110
    %v291 = vmul.f32 %v219, %v110
    %v292 = vmul.f32 %v220, %v110
    %v293 = vmul.f32 %v221, %v110
    %v294 = vmul.f32 %v222, %v110
    %v295 = vadd.f32 %v287, %v272
    %v296 = vadd.f32 %v288, %v274
    %v297 = vadd.f32 %v289, %v276
    %v298 = vadd.f32 %v290, %v278
    %v299 = vadd.f32 %v291, %v280
    %v300 = vadd.f32 %v292, %v282
    %v301 = vadd.f32 %v293, %v284
    %v302 = vadd.f32 %v294, %v286
    %v303 = vsel %vm223, %v272, %v295
    %v304 = vsel %vm224, %v274, %v296
    %v305 = vsel %vm225, %v276, %v297
    %v306 = vsel %vm226, %v278, %v298
    %v307 = vsel %vm227, %v280, %v299
    %v308 = vsel %vm228, %v282, %v300
    %v309 = vsel %vm229, %v284, %v301
    %v310 = vsel %vm230, %v286, %v302
    %vm311 = vcmp.gt.f32.partialorder %v303, 0.5
    %vm312 = vcmp.gt.f32.partialorder %v304, 0.5
    %vm313 = vcmp.gt.f32.partialorder %v305, 0.5
    %vm314 = vcmp.gt.f32.partialorder %v306, 0.5
    %vm315 = vcmp.gt.f32.partialorder %v307, 0.5
    %vm316 = vcmp.gt.f32.partialorder %v308, 0.5
    %vm317 = vcmp.gt.f32.partialorder %v309, 0.5
    %vm318 = vcmp.gt.f32.partialorder %v310, 0.5
    %v319 = vsel %vm311, 1, 0
    %v320 = vsel %vm312, 1, 0
    %v321 = vsel %vm313, 1, 0
    %v322 = vsel %vm314, 1, 0
    %v323 = vsel %vm315, 1, 0
    %v324 = vsel %vm316, 1, 0
    %v325 = vsel %vm317, 1, 0
    %v326 = vsel %vm318, 1, 0
    %v327 = vcvt.s32.f32 %v319
    %v328 = vcvt.s32.f32 %v320
    %v329 = vcvt.s32.f32 %v321
    %v330 = vcvt.s32.f32 %v322
    %v331 = vcvt.s32.f32 %v323
    %v332 = vcvt.s32.f32 %v324
    %v333 = vcvt.s32.f32 %v325
    %v334 = vcvt.s32.f32 %v326
    %s335 = scalar_lea.vmem [#allocation6], 3
    %336 = vst.msk [vmem:[%s335] ss:$8 sm:$0x3] %vm70, %v327
    %337 = vst.msk [vmem:[%s335] ss:$8 sm:$0x0] %vm70, %v327
    %s338 = scalar_lea.vmem [#allocation6], 19
    %339 = vst.msk [vmem:[%s338] ss:$8 sm:$0x3] %vm70, %v328
    %340 = vst.msk [vmem:[%s338] ss:$8 sm:$0x0] %vm70, %v328
    %s341 = scalar_lea.vmem [#allocation6], 35
    %342 = vst.msk [vmem:[%s341] ss:$8 sm:$0x3] %vm70, %v329
    %343 = vst.msk [vmem:[%s341] ss:$8 sm:$0x0] %vm70, %v329
    %s344 = scalar_lea.vmem [#allocation6], 51
    %345 = vst.msk [vmem:[%s344] ss:$8 sm:$0x3] %vm70, %v330
    %346 = vst.msk [vmem:[%s344] ss:$8 sm:$0x0] %vm70, %v330
    %s347 = scalar_lea.vmem [#allocation6], 67
    %348 = vst.msk [vmem:[%s347] ss:$8 sm:$0x3] %vm70, %v331
    %349 = vst.msk [vmem:[%s347] ss:$8 sm:$0x0] %vm70, %v331
    %s350 = scalar_lea.vmem [#allocation6], 83
    %351 = vst.msk [vmem:[%s350] ss:$8 sm:$0x3] %vm70, %v332
    %352 = vst.msk [vmem:[%s350] ss:$8 sm:$0x0] %vm70, %v332
    %s353 = scalar_lea.vmem [#allocation6], 99
    %354 = vst.msk [vmem:[%s353] ss:$8 sm:$0x3] %vm70, %v333
    %355 = vst.msk [vmem:[%s353] ss:$8 sm:$0x0] %vm70, %v333
    %s356 = scalar_lea.vmem [#allocation6], 115
    %357 = vst.msk [vmem:[%s356] ss:$8 sm:$0x3] %vm70, %v334
    %358 = vst.msk [vmem:[%s356] ss:$8 sm:$0x0] %vm70, %v334
    %s359 = scalar_lea.vmem [#allocation3], 4
    %v360 = vld [vmem:[%s359] ss:$8 sm:$0x3]
    %s361 = scalar_lea.vmem [#allocation3], 20
    %v362 = vld [vmem:[%s361] ss:$8 sm:$0x3]
    %s363 = scalar_lea.vmem [#allocation3], 36
    %v364 = vld [vmem:[%s363] ss:$8 sm:$0x3]
    %s365 = scalar_lea.vmem [#allocation3], 52
    %v366 = vld [vmem:[%s365] ss:$8 sm:$0x3]
    %s367 = scalar_lea.vmem [#allocation3], 68
    %v368 = vld [vmem:[%s367] ss:$8 sm:$0x3]
    %s369 = scalar_lea.vmem [#allocation3], 84
    %v370 = vld [vmem:[%s369] ss:$8 sm:$0x3]
    %s371 = scalar_lea.vmem [#allocation3], 100
    %v372 = vld [vmem:[%s371] ss:$8 sm:$0x3]
    %s373 = scalar_lea.vmem [#allocation3], 116
    %v374 = vld [vmem:[%s373] ss:$8 sm:$0x3]
    %v375 = vmul.f32 %v303, %v110
    %v376 = vmul.f32 %v304, %v110
    %v377 = vmul.f32 %v305, %v110
    %v378 = vmul.f32 %v306, %v110
    %v379 = vmul.f32 %v307, %v110
    %v380 = vmul.f32 %v308, %v110
    %v381 = vmul.f32 %v309, %v110
    %v382 = vmul.f32 %v310, %v110
    %v383 = vadd.f32 %v375, %v360
    %v384 = vadd.f32 %v376, %v362
    %v385 = vadd.f32 %v377, %v364
    %v386 = vadd.f32 %v378, %v366
    %v387 = vadd.f32 %v379, %v368
    %v388 = vadd.f32 %v380, %v370
    %v389 = vadd.f32 %v381, %v372
    %v390 = vadd.f32 %v382, %v374
    %v391 = vsel %vm311, %v360, %v383
    %v392 = vsel %vm312, %v362, %v384
    %v393 = vsel %vm313, %v364, %v385
    %v394 = vsel %vm314, %v366, %v386
    %v395 = vsel %vm315, %v368, %v387
    %v396 = vsel %vm316, %v370, %v388
    %v397 = vsel %vm317, %v372, %v389
    %v398 = vsel %vm318, %v374, %v390
    %vm399 = vcmp.gt.f32.partialorder %v391, 0.5
    %vm400 = vcmp.gt.f32.partialorder %v392, 0.5
    %vm401 = vcmp.gt.f32.partialorder %v393, 0.5
    %vm402 = vcmp.gt.f32.partialorder %v394, 0.5
    %vm403 = vcmp.gt.f32.partialorder %v395, 0.5
    %vm404 = vcmp.gt.f32.partialorder %v396, 0.5
    %vm405 = vcmp.gt.f32.partialorder %v397, 0.5
    %vm406 = vcmp.gt.f32.partialorder %v398, 0.5
    %v407 = vsel %vm399, 1, 0
    %v408 = vsel %vm400, 1, 0
    %v409 = vsel %vm401, 1, 0
    %v410 = vsel %vm402, 1, 0
    %v411 = vsel %vm403, 1, 0
    %v412 = vsel %vm404, 1, 0
    %v413 = vsel %vm405, 1, 0
    %v414 = vsel %vm406, 1, 0
    %v415 = vcvt.s32.f32 %v407
    %v416 = vcvt.s32.f32 %v408
    %v417 = vcvt.s32.f32 %v409
    %v418 = vcvt.s32.f32 %v410
    %v419 = vcvt.s32.f32 %v411
    %v420 = vcvt.s32.f32 %v412
    %v421 = vcvt.s32.f32 %v413
    %v422 = vcvt.s32.f32 %v414
    %s423 = scalar_lea.vmem [#allocation6], 4
    %424 = vst.msk [vmem:[%s423] ss:$8 sm:$0x3] %vm70, %v415
    %425 = vst.msk [vmem:[%s423] ss:$8 sm:$0x0] %vm70, %v415
    %s426 = scalar_lea.vmem [#allocation6], 20
    %427 = vst.msk [vmem:[%s426] ss:$8 sm:$0x3] %vm70, %v416
    %428 = vst.msk [vmem:[%s426] ss:$8 sm:$0x0] %vm70, %v416
    %s429 = scalar_lea.vmem [#allocation6], 36
    %430 = vst.msk [vmem:[%s429] ss:$8 sm:$0x3] %vm70, %v417
    %431 = vst.msk [vmem:[%s429] ss:$8 sm:$0x0] %vm70, %v417
    %s432 = scalar_lea.vmem [#allocation6], 52
    %433 = vst.msk [vmem:[%s432] ss:$8 sm:$0x3] %vm70, %v418
    %434 = vst.msk [vmem:[%s432] ss:$8 sm:$0x0] %vm70, %v418
    %s435 = scalar_lea.vmem [#allocation6], 68
    %436 = vst.msk [vmem:[%s435] ss:$8 sm:$0x3] %vm70, %v419
    %437 = vst.msk [vmem:[%s435] ss:$8 sm:$0x0] %vm70, %v419
    %s438 = scalar_lea.vmem [#allocation6], 84
    %439 = vst.msk [vmem:[%s438] ss:$8 sm:$0x3] %vm70, %v420
    %440 = vst.msk [vmem:[%s438] ss:$8 sm:$0x0] %vm70, %v420
    %s441 = scalar_lea.vmem [#allocation6], 100
    %442 = vst.msk [vmem:[%s441] ss:$8 sm:$0x3] %vm70, %v421
    %443 = vst.msk [vmem:[%s441] ss:$8 sm:$0x0] %vm70, %v421
    %s444 = scalar_lea.vmem [#allocation6], 116
    %445 = vst.msk [vmem:[%s444] ss:$8 sm:$0x3] %vm70, %v422
    %446 = vst.msk [vmem:[%s444] ss:$8 sm:$0x0] %vm70, %v422
    %s447 = scalar_lea.vmem [#allocation3], 5
    %v448 = vld [vmem:[%s447] ss:$8 sm:$0x3]
    %s449 = scalar_lea.vmem [#allocation3], 21
    %v450 = vld [vmem:[%s449] ss:$8 sm:$0x3]
    %s451 = scalar_lea.vmem [#allocation3], 37
    %v452 = vld [vmem:[%s451] ss:$8 sm:$0x3]
    %s453 = scalar_lea.vmem [#allocation3], 53
    %v454 = vld [vmem:[%s453] ss:$8 sm:$0x3]
    %s455 = scalar_lea.vmem [#allocation3], 69
    %v456 = vld [vmem:[%s455] ss:$8 sm:$0x3]
    %s457 = scalar_lea.vmem [#allocation3], 85
    %v458 = vld [vmem:[%s457] ss:$8 sm:$0x3]
    %s459 = scalar_lea.vmem [#allocation3], 101
    %v460 = vld [vmem:[%s459] ss:$8 sm:$0x3]
    %s461 = scalar_lea.vmem [#allocation3], 117
    %v462 = vld [vmem:[%s461] ss:$8 sm:$0x3]
    %v463 = vmul.f32 %v391, %v110
    %v464 = vmul.f32 %v392, %v110
    %v465 = vmul.f32 %v393, %v110
    %v466 = vmul.f32 %v394, %v110
    %v467 = vmul.f32 %v395, %v110
    %v468 = vmul.f32 %v396, %v110
    %v469 = vmul.f32 %v397, %v110
    %v470 = vmul.f32 %v398, %v110
    %v471 = vadd.f32 %v463, %v448
    %v472 = vadd.f32 %v464, %v450
    %v473 = vadd.f32 %v465, %v452
    %v474 = vadd.f32 %v466, %v454
    %v475 = vadd.f32 %v467, %v456
    %v476 = vadd.f32 %v468, %v458
    %v477 = vadd.f32 %v469, %v460
    %v478 = vadd.f32 %v470, %v462
    %v479 = vsel %vm399, %v448, %v471
    %v480 = vsel %vm400, %v450, %v472
    %v481 = vsel %vm401, %v452, %v473
    %v482 = vsel %vm402, %v454, %v474
    %v483 = vsel %vm403, %v456, %v475
    %v484 = vsel %vm404, %v458, %v476
    %v485 = vsel %vm405, %v460, %v477
    %v486 = vsel %vm406, %v462, %v478
    %vm487 = vcmp.gt.f32.partialorder %v479, 0.5
    %vm488 = vcmp.gt.f32.partialorder %v480, 0.5
    %vm489 = vcmp.gt.f32.partialorder %v481, 0.5
    %vm490 = vcmp.gt.f32.partialorder %v482, 0.5
    %vm491 = vcmp.gt.f32.partialorder %v483, 0.5
    %vm492 = vcmp.gt.f32.partialorder %v484, 0.5
    %vm493 = vcmp.gt.f32.partialorder %v485, 0.5
    %vm494 = vcmp.gt.f32.partialorder %v486, 0.5
    %v495 = vsel %vm487, 1, 0
    %v496 = vsel %vm488, 1, 0
    %v497 = vsel %vm489, 1, 0
    %v498 = vsel %vm490, 1, 0
    %v499 = vsel %vm491, 1, 0
    %v500 = vsel %vm492, 1, 0
    %v501 = vsel %vm493, 1, 0
    %v502 = vsel %vm494, 1, 0
    %v503 = vcvt.s32.f32 %v495
    %v504 = vcvt.s32.f32 %v496
    %v505 = vcvt.s32.f32 %v497
    %v506 = vcvt.s32.f32 %v498
    %v507 = vcvt.s32.f32 %v499
    %v508 = vcvt.s32.f32 %v500
    %v509 = vcvt.s32.f32 %v501
    %v510 = vcvt.s32.f32 %v502
    %s511 = scalar_lea.vmem [#allocation6], 5
    %512 = vst.msk [vmem:[%s511] ss:$8 sm:$0x3] %vm70, %v503
    %513 = vst.msk [vmem:[%s511] ss:$8 sm:$0x0] %vm70, %v503
    %s514 = scalar_lea.vmem [#allocation6], 21
    %515 = vst.msk [vmem:[%s514] ss:$8 sm:$0x3] %vm70, %v504
    %516 = vst.msk [vmem:[%s514] ss:$8 sm:$0x0] %vm70, %v504
    %s517 = scalar_lea.vmem [#allocation6], 37
    %518 = vst.msk [vmem:[%s517] ss:$8 sm:$0x3] %vm70, %v505
    %519 = vst.msk [vmem:[%s517] ss:$8 sm:$0x0] %vm70, %v505
    %s520 = scalar_lea.vmem [#allocation6], 53
    %521 = vst.msk [vmem:[%s520] ss:$8 sm:$0x3] %vm70, %v506
    %522 = vst.msk [vmem:[%s520] ss:$8 sm:$0x0] %vm70, %v506
    %s523 = scalar_lea.vmem [#allocation6], 69
    %524 = vst.msk [vmem:[%s523] ss:$8 sm:$0x3] %vm70, %v507
    %525 = vst.msk [vmem:[%s523] ss:$8 sm:$0x0] %vm70, %v507
    %s526 = scalar_lea.vmem [#allocation6], 85
    %527 = vst.msk [vmem:[%s526] ss:$8 sm:$0x3] %vm70, %v508
    %528 = vst.msk [vmem:[%s526] ss:$8 sm:$0x0] %vm70, %v508
    %s529 = scalar_lea.vmem [#allocation6], 101
    %530 = vst.msk [vmem:[%s529] ss:$8 sm:$0x3] %vm70, %v509
    %531 = vst.msk [vmem:[%s529] ss:$8 sm:$0x0] %vm70, %v509
    %s532 = scalar_lea.vmem [#allocation6], 117
    %533 = vst.msk [vmem:[%s532] ss:$8 sm:$0x3] %vm70, %v510
    %534 = vst.msk [vmem:[%s532] ss:$8 sm:$0x0] %vm70, %v510
    %s535 = scalar_lea.vmem [#allocation3], 6
    %v536 = vld [vmem:[%s535] ss:$8 sm:$0x3]
    %s537 = scalar_lea.vmem [#allocation3], 22
    %v538 = vld [vmem:[%s537] ss:$8 sm:$0x3]
    %s539 = scalar_lea.vmem [#allocation3], 38
    %v540 = vld [vmem:[%s539] ss:$8 sm:$0x3]
    %s541 = scalar_lea.vmem [#allocation3], 54
    %v542 = vld [vmem:[%s541] ss:$8 sm:$0x3]
    %s543 = scalar_lea.vmem [#allocation3], 70
    %v544 = vld [vmem:[%s543] ss:$8 sm:$0x3]
    %s545 = scalar_lea.vmem [#allocation3], 86
    %v546 = vld [vmem:[%s545] ss:$8 sm:$0x3]
    %s547 = scalar_lea.vmem [#allocation3], 102
    %v548 = vld [vmem:[%s547] ss:$8 sm:$0x3]
    %s549 = scalar_lea.vmem [#allocation3], 118
    %v550 = vld [vmem:[%s549] ss:$8 sm:$0x3]
    %v551 = vmul.f32 %v479, %v110
    %v552 = vmul.f32 %v480, %v110
    %v553 = vmul.f32 %v481, %v110
    %v554 = vmul.f32 %v482, %v110
    %v555 = vmul.f32 %v483, %v110
    %v556 = vmul.f32 %v484, %v110
    %v557 = vmul.f32 %v485, %v110
    %v558 = vmul.f32 %v486, %v110
    %v559 = vadd.f32 %v551, %v536
    %v560 = vadd.f32 %v552, %v538
    %v561 = vadd.f32 %v553, %v540
    %v562 = vadd.f32 %v554, %v542
    %v563 = vadd.f32 %v555, %v544
    %v564 = vadd.f32 %v556, %v546
    %v565 = vadd.f32 %v557, %v548
    %v566 = vadd.f32 %v558, %v550
    %v567 = vsel %vm487, %v536, %v559
    %v568 = vsel %vm488, %v538, %v560
    %v569 = vsel %vm489, %v540, %v561
    %v570 = vsel %vm490, %v542, %v562
    %v571 = vsel %vm491, %v544, %v563
    %v572 = vsel %vm492, %v546, %v564
    %v573 = vsel %vm493, %v548, %v565
    %v574 = vsel %vm494, %v550, %v566
    %vm575 = vcmp.gt.f32.partialorder %v567, 0.5
    %vm576 = vcmp.gt.f32.partialorder %v568, 0.5
    %vm577 = vcmp.gt.f32.partialorder %v569, 0.5
    %vm578 = vcmp.gt.f32.partialorder %v570, 0.5
    %vm579 = vcmp.gt.f32.partialorder %v571, 0.5
    %vm580 = vcmp.gt.f32.partialorder %v572, 0.5
    %vm581 = vcmp.gt.f32.partialorder %v573, 0.5
    %vm582 = vcmp.gt.f32.partialorder %v574, 0.5
    %v583 = vsel %vm575, 1, 0
    %v584 = vsel %vm576, 1, 0
    %v585 = vsel %vm577, 1, 0
    %v586 = vsel %vm578, 1, 0
    %v587 = vsel %vm579, 1, 0
    %v588 = vsel %vm580, 1, 0
    %v589 = vsel %vm581, 1, 0
    %v590 = vsel %vm582, 1, 0
    %v591 = vcvt.s32.f32 %v583
    %v592 = vcvt.s32.f32 %v584
    %v593 = vcvt.s32.f32 %v585
    %v594 = vcvt.s32.f32 %v586
    %v595 = vcvt.s32.f32 %v587
    %v596 = vcvt.s32.f32 %v588
    %v597 = vcvt.s32.f32 %v589
    %v598 = vcvt.s32.f32 %v590
    %s599 = scalar_lea.vmem [#allocation6], 6
    %600 = vst.msk [vmem:[%s599] ss:$8 sm:$0x3] %vm70, %v591
    %601 = vst.msk [vmem:[%s599] ss:$8 sm:$0x0] %vm70, %v591
    %s602 = scalar_lea.vmem [#allocation6], 22
    %603 = vst.msk [vmem:[%s602] ss:$8 sm:$0x3] %vm70, %v592
    %604 = vst.msk [vmem:[%s602] ss:$8 sm:$0x0] %vm70, %v592
    %s605 = scalar_lea.vmem [#allocation6], 38
    %606 = vst.msk [vmem:[%s605] ss:$8 sm:$0x3] %vm70, %v593
    %607 = vst.msk [vmem:[%s605] ss:$8 sm:$0x0] %vm70, %v593
    %s608 = scalar_lea.vmem [#allocation6], 54
    %609 = vst.msk [vmem:[%s608] ss:$8 sm:$0x3] %vm70, %v594
    %610 = vst.msk [vmem:[%s608] ss:$8 sm:$0x0] %vm70, %v594
    %s611 = scalar_lea.vmem [#allocation6], 70
    %612 = vst.msk [vmem:[%s611] ss:$8 sm:$0x3] %vm70, %v595
    %613 = vst.msk [vmem:[%s611] ss:$8 sm:$0x0] %vm70, %v595
    %s614 = scalar_lea.vmem [#allocation6], 86
    %615 = vst.msk [vmem:[%s614] ss:$8 sm:$0x3] %vm70, %v596
    %616 = vst.msk [vmem:[%s614] ss:$8 sm:$0x0] %vm70, %v596
    %s617 = scalar_lea.vmem [#allocation6], 102
    %618 = vst.msk [vmem:[%s617] ss:$8 sm:$0x3] %vm70, %v597
    %619 = vst.msk [vmem:[%s617] ss:$8 sm:$0x0] %vm70, %v597
    %s620 = scalar_lea.vmem [#allocation6], 118
    %621 = vst.msk [vmem:[%s620] ss:$8 sm:$0x3] %vm70, %v598
    %622 = vst.msk [vmem:[%s620] ss:$8 sm:$0x0] %vm70, %v598
    %s623 = scalar_lea.vmem [#allocation3], 7
    %v624 = vld [vmem:[%s623] ss:$8 sm:$0x3]
    %s625 = scalar_lea.vmem [#allocation3], 23
    %v626 = vld [vmem:[%s625] ss:$8 sm:$0x3]
    %s627 = scalar_lea.vmem [#allocation3], 39
    %v628 = vld [vmem:[%s627] ss:$8 sm:$0x3]
    %s629 = scalar_lea.vmem [#allocation3], 55
    %v630 = vld [vmem:[%s629] ss:$8 sm:$0x3]
    %s631 = scalar_lea.vmem [#allocation3], 71
    %v632 = vld [vmem:[%s631] ss:$8 sm:$0x3]
    %s633 = scalar_lea.vmem [#allocation3], 87
    %v634 = vld [vmem:[%s633] ss:$8 sm:$0x3]
    %s635 = scalar_lea.vmem [#allocation3], 103
    %v636 = vld [vmem:[%s635] ss:$8 sm:$0x3]
    %s637 = scalar_lea.vmem [#allocation3], 119
    %v638 = vld [vmem:[%s637] ss:$8 sm:$0x3]
    %v639 = vmul.f32 %v567, %v110
    %v640 = vmul.f32 %v568, %v110
    %v641 = vmul.f32 %v569, %v110
    %v642 = vmul.f32 %v570, %v110
    %v643 = vmul.f32 %v571, %v110
    %v644 = vmul.f32 %v572, %v110
    %v645 = vmul.f32 %v573, %v110
    %v646 = vmul.f32 %v574, %v110
    %v647 = vadd.f32 %v639, %v624
    %v648 = vadd.f32 %v640, %v626
    %v649 = vadd.f32 %v641, %v628
    %v650 = vadd.f32 %v642, %v630
    %v651 = vadd.f32 %v643, %v632
    %v652 = vadd.f32 %v644, %v634
    %v653 = vadd.f32 %v645, %v636
    %v654 = vadd.f32 %v646, %v638
    %v655 = vsel %vm575, %v624, %v647
    %v656 = vsel %vm576, %v626, %v648
    %v657 = vsel %vm577, %v628, %v649
    %v658 = vsel %vm578, %v630, %v650
    %v659 = vsel %vm579, %v632, %v651
    %v660 = vsel %vm580, %v634, %v652
    %v661 = vsel %vm581, %v636, %v653
    %v662 = vsel %vm582, %v638, %v654
    %vm663 = vcmp.gt.f32.partialorder %v655, 0.5
    %vm664 = vcmp.gt.f32.partialorder %v656, 0.5
    %vm665 = vcmp.gt.f32.partialorder %v657, 0.5
    %vm666 = vcmp.gt.f32.partialorder %v658, 0.5
    %vm667 = vcmp.gt.f32.partialorder %v659, 0.5
    %vm668 = vcmp.gt.f32.partialorder %v660, 0.5
    %vm669 = vcmp.gt.f32.partialorder %v661, 0.5
    %vm670 = vcmp.gt.f32.partialorder %v662, 0.5
    %v671 = vsel %vm663, 1, 0
    %v672 = vsel %vm664, 1, 0
    %v673 = vsel %vm665, 1, 0
    %v674 = vsel %vm666, 1, 0
    %v675 = vsel %vm667, 1, 0
    %v676 = vsel %vm668, 1, 0
    %v677 = vsel %vm669, 1, 0
    %v678 = vsel %vm670, 1, 0
    %v679 = vcvt.s32.f32 %v671
    %v680 = vcvt.s32.f32 %v672
    %v681 = vcvt.s32.f32 %v673
    %v682 = vcvt.s32.f32 %v674
    %v683 = vcvt.s32.f32 %v675
    %v684 = vcvt.s32.f32 %v676
    %v685 = vcvt.s32.f32 %v677
    %v686 = vcvt.s32.f32 %v678
    %s687 = scalar_lea.vmem [#allocation6], 7
    %688 = vst.msk [vmem:[%s687] ss:$8 sm:$0x3] %vm70, %v679
    %689 = vst.msk [vmem:[%s687] ss:$8 sm:$0x0] %vm70, %v679
    %s690 = scalar_lea.vmem [#allocation6], 23
    %691 = vst.msk [vmem:[%s690] ss:$8 sm:$0x3] %vm70, %v680
    %692 = vst.msk [vmem:[%s690] ss:$8 sm:$0x0] %vm70, %v680
    %s693 = scalar_lea.vmem [#allocation6], 39
    %694 = vst.msk [vmem:[%s693] ss:$8 sm:$0x3] %vm70, %v681
    %695 = vst.msk [vmem:[%s693] ss:$8 sm:$0x0] %vm70, %v681
    %s696 = scalar_lea.vmem [#allocation6], 55
    %697 = vst.msk [vmem:[%s696] ss:$8 sm:$0x3] %vm70, %v682
    %698 = vst.msk [vmem:[%s696] ss:$8 sm:$0x0] %vm70, %v682
    %s699 = scalar_lea.vmem [#allocation6], 71
    %700 = vst.msk [vmem:[%s699] ss:$8 sm:$0x3] %vm70, %v683
    %701 = vst.msk [vmem:[%s699] ss:$8 sm:$0x0] %vm70, %v683
    %s702 = scalar_lea.vmem [#allocation6], 87
    %703 = vst.msk [vmem:[%s702] ss:$8 sm:$0x3] %vm70, %v684
    %704 = vst.msk [vmem:[%s702] ss:$8 sm:$0x0] %vm70, %v684
    %s705 = scalar_lea.vmem [#allocation6], 103
    %706 = vst.msk [vmem:[%s705] ss:$8 sm:$0x3] %vm70, %v685
    %707 = vst.msk [vmem:[%s705] ss:$8 sm:$0x0] %vm70, %v685
    %s708 = scalar_lea.vmem [#allocation6], 119
    %709 = vst.msk [vmem:[%s708] ss:$8 sm:$0x3] %vm70, %v686
    %710 = vst.msk [vmem:[%s708] ss:$8 sm:$0x0] %vm70, %v686
    // Predicated region
    $region14: #{tpu_custom_call.1} parent=1 // pred_check
      _
    $region15: #{tpu_custom_call.1} parent=1 // pred_check_branch
      %712 = sbr.rel (0) target = $region17
    $region16: #{tpu_custom_call.1} parent=1 // pred_region
      %s714 = ssub.s32 2048, 2048
      %715 = vsyncadd [#allocation5], %s714
      %s716 = sshll.u32 [#allocation6], 4
      %s717 = int_to_ptr.vmem [resolvable:$true] %s716
      %722 = dma.vmem_to_hbm [thread:$0]  %s717, 2048, %s2, [#allocation5], 256, 256, 16
    $region17: #{tpu_custom_call.1} parent=1 // pred_fallthru
      _
    // Predicated region
    $region18: #{tpu_custom_call.1} parent=1 // pred_check
      _
    $region19: #{tpu_custom_call.1} parent=1 // pred_check_branch
      %724 = sbr.rel (0) target = $region21
    $region20: #{tpu_custom_call.1} parent=1 // pred_region
      %725 = dma.done [#allocation5], 2048
    $region21: #{tpu_custom_call.1} parent=1 // pred_fallthru
      _
    %726 = vsyncpa [#allocation4], 1
    %727 = vsyncpa [#allocation5], 1

</llo_original>
